<compile_context>
chip_gen: v6e
topology: v6e:2x2x1
jax: 0.10.0
libtpu: 0.0.40
codegen_flags: <defaults>
</compile_context>

<pallas_src>
import functools
import math

import jax
import jax.numpy as jnp
from jax import lax
from jax.experimental import pallas as pl
from jax.experimental.pallas import tpu as pltpu


def _layernorm_kernel(x_ref, wb_ref, o_ref, *, eps: float):
    """LayerNorm over the last dim for one (block_rows, d_model) tile.

    x_ref  : VMEM (block_rows, d_model)  input rows
    wb_ref : VMEM (2, d_model)           row 0 = scale w, row 1 = shift b
                                         (constant index_map -> grid-resident)
    o_ref  : VMEM (block_rows, d_model)  output rows
    """
    x = x_ref[...].astype(jnp.float32)

    # One-pass moments: per-row lane reductions (XLU) of x and x*x, then
    # var = E[x^2] - mean^2 (clamped at 0 for numerical safety). Matches
    # torch's unbiased=False variance; f32 accumulation keeps it accurate.
    mean = jnp.mean(x, axis=-1, keepdims=True)
    mean_sq = jnp.mean(x * x, axis=-1, keepdims=True)
    var = jnp.maximum(mean_sq - mean * mean, 0.0)
    inv_std = lax.rsqrt(var + eps)  # EUP transcendental slot (free vs VALU)

    w = wb_ref[0:1, :].astype(jnp.float32)  # (1, d_model), broadcasts over rows
    b = wb_ref[1:2, :].astype(jnp.float32)

    o_ref[...] = ((x - mean) * inv_std * w + b).astype(o_ref.dtype)


def layer_norm(
    residual: jax.Array,
    w: jax.Array,
    b: jax.Array,
    *,
    eps: float = 1e-5,
    block_rows: int = 1024,                       # sweep 512..2048 per generation
    vmem_buffer_budget_bytes: int = 24 * 1024 * 1024,
) -> jax.Array:
    """Pallas equivalent of `LayerNorm.forward` (last-dim normalization)."""
    *lead, d_model = residual.shape
    n = math.prod(lead) if lead else 1
    x = residual.reshape(n, d_model)              # free reshape (contiguous)
    itemsize = jnp.dtype(residual.dtype).itemsize

    # Pick the row block: multiple of 8 (sublane), <= n, <= block_rows, and
    # small enough that the pipeline buffers (x + out, double-buffered) fit
    # the VMEM buffer budget. No padding: the last grid step is a masked
    # partial block when blk does not divide n.
    if n <= 8:
        blk = n                                   # full-extent escape hatch
    else:
        blk = min(block_rows, n)
        blk = max(8, (blk // 8) * 8)
        max_blk = vmem_buffer_budget_bytes // (4 * d_model * itemsize)
        max_blk = max(8, (max_blk // 8) * 8)
        blk = min(blk, max_blk)

    grid = pl.cdiv(n, blk)

    # Merge scale/shift into one grid-resident (2, d_model) tile -> one DMA
    # stream and one (tiny) double buffer instead of two.
    wb = jnp.stack([w.reshape(d_model), b.reshape(d_model)]).astype(jnp.float32)

    # Explicit VMEM budget: 4 tiles of pipeline buffers (x + out, x2 buffers),
    # the resident wb tile, plus headroom for a few f32 tile temporaries.
    buffer_bytes = 4 * blk * d_model * itemsize + 4 * 2 * d_model * 4
    vmem_limit = buffer_bytes + 4 * blk * d_model * 4 + (2 << 20)
    vmem_limit = max(vmem_limit, 16 << 20)
    vmem_limit = min(vmem_limit, 48 << 20)        # stays under v7x's 64 MiB VMEM

    cost = pl.CostEstimate(
        flops=8 * n * d_model,
        transcendentals=n,                        # one rsqrt per row
        bytes_accessed=2 * n * d_model * itemsize + 2 * d_model * 4,
    )

    out = pl.pallas_call(
        functools.partial(_layernorm_kernel, eps=eps),
        out_shape=jax.ShapeDtypeStruct((n, d_model), residual.dtype),
        grid_spec=pltpu.PrefetchScalarGridSpec(
            num_scalar_prefetch=0,
            grid=(grid,),
            in_specs=[
                pl.BlockSpec((blk, d_model), lambda i: (i, 0)),
                pl.BlockSpec((2, d_model), lambda i: (0, 0)),   # resident w/b
            ],
            out_specs=pl.BlockSpec((blk, d_model), lambda i: (i, 0)),
        ),
        compiler_params=pltpu.CompilerParams(
            # Row blocks are independent -> shard across TensorCores on v7x.
            dimension_semantics=("parallel",),
            vmem_limit_bytes=vmem_limit,
        ),
        cost_estimate=cost,
    )(x, wb)

    return out.reshape(residual.shape)


if __name__ == "__main__":
    # Small shapes consistent with the module's Config (d_model=768, eps=1e-5).
    batch = 2
    posn = 8
    d_model = 768
    eps = 1e-5

    key = jax.random.PRNGKey(0)
    k_x, k_w, k_b = jax.random.split(key, 3)

    residual = jax.random.normal(k_x, (batch, posn, d_model), dtype=jnp.float32)
    # Module init is w=ones, b=zeros; perturb them so scale/shift is exercised.
    w = 1.0 + 0.1 * jax.random.normal(k_w, (d_model,), dtype=jnp.float32)
    b = 0.1 * jax.random.normal(k_b, (d_model,), dtype=jnp.float32)

    out = jax.block_until_ready(layer_norm(residual, w, b, eps=eps))

    # Pure-JAX reference matching torch semantics (unbiased=False variance).
    mean = jnp.mean(residual, axis=-1, keepdims=True)
    var = jnp.mean((residual - mean) ** 2, axis=-1, keepdims=True)
    ref = (residual - mean) * w / jnp.sqrt(var + eps) + b

    assert out.shape == (batch, posn, d_model)
    assert out.dtype == residual.dtype
    assert jnp.allclose(out, ref, rtol=1e-5, atol=1e-5), "Pallas LayerNorm mismatch vs reference"

    print("KERNEL_OK")
</pallas_src>

<mosaic_0001>
module attributes {stable_mosaic.version = 11 : i64} {
  func.func @_layernorm_kernel(%arg0: i32, %arg1: memref<16x768xf32, #tpu.memory_space<vmem>>, %arg2: memref<2x768xf32, #tpu.memory_space<vmem>>, %arg3: memref<16x768xf32, #tpu.memory_space<vmem>>) attributes {dimension_semantics = [#tpu.dimension_semantics<parallel>], iteration_bounds = array<i64: 1>, scalar_prefetch = 0 : i64, scratch_operands = 0 : i64, tpu.core_type = #tpu.core_type<tc>, window_params = [{transform_indices = @transform_0, window_bounds = array<i64: 16, 768>}, {pipeline_mode = #tpu.pipeline_mode<synchronous>, transform_indices = @transform_1, window_bounds = array<i64: 2, 768>}, {transform_indices = @transform_2, window_bounds = array<i64: 16, 768>}]} {
    %c0 = arith.constant 0 : index
    %c0_0 = arith.constant 0 : index
    %0 = vector.load %arg1[%c0, %c0_0] : memref<16x768xf32, #tpu.memory_space<vmem>>, vector<16x768xf32>
    %cst = arith.constant dense<0.000000e+00> : vector<16xf32>
    %1 = vector.multi_reduction <add>, %0, %cst [1] : vector<16x768xf32> to vector<16xf32>
    %2 = vector.shape_cast %1 : vector<16xf32> to vector<16x1xf32>
    %cst_1 = arith.constant 7.680000e+02 : f32
    %3 = vector.broadcast %cst_1 : f32 to vector<16x1xf32>
    %4 = arith.divf %2, %3 : vector<16x1xf32>
    %5 = arith.mulf %0, %0 : vector<16x768xf32>
    %cst_2 = arith.constant dense<0.000000e+00> : vector<16xf32>
    %6 = vector.multi_reduction <add>, %5, %cst_2 [1] : vector<16x768xf32> to vector<16xf32>
    %7 = vector.shape_cast %6 : vector<16xf32> to vector<16x1xf32>
    %cst_3 = arith.constant 7.680000e+02 : f32
    %8 = vector.broadcast %cst_3 : f32 to vector<16x1xf32>
    %9 = arith.divf %7, %8 : vector<16x1xf32>
    %10 = arith.mulf %4, %4 : vector<16x1xf32>
    %11 = arith.subf %9, %10 : vector<16x1xf32>
    %cst_4 = arith.constant 0.000000e+00 : f32
    %12 = vector.broadcast %cst_4 : f32 to vector<16x1xf32>
    %13 = arith.maximumf %11, %12 : vector<16x1xf32>
    %cst_5 = arith.constant 9.99999974E-6 : f32
    %14 = vector.broadcast %cst_5 : f32 to vector<16x1xf32>
    %15 = arith.addf %13, %14 : vector<16x1xf32>
    %16 = math.rsqrt %15 : vector<16x1xf32>
    %c0_6 = arith.constant 0 : index
    %c0_7 = arith.constant 0 : index
    %17 = vector.load %arg2[%c0_6, %c0_7] : memref<2x768xf32, #tpu.memory_space<vmem>>, vector<1x768xf32>
    %c1 = arith.constant 1 : index
    %c0_8 = arith.constant 0 : index
    %18 = vector.load %arg2[%c1, %c0_8] : memref<2x768xf32, #tpu.memory_space<vmem>>, vector<1x768xf32>
    %19 = vector.broadcast %4 : vector<16x1xf32> to vector<16x768xf32>
    %20 = arith.subf %0, %19 : vector<16x768xf32>
    %21 = vector.broadcast %16 : vector<16x1xf32> to vector<16x768xf32>
    %22 = arith.mulf %20, %21 : vector<16x768xf32>
    %23 = vector.broadcast %17 : vector<1x768xf32> to vector<16x768xf32>
    %24 = arith.mulf %22, %23 : vector<16x768xf32>
    %25 = vector.broadcast %18 : vector<1x768xf32> to vector<16x768xf32>
    %26 = arith.addf %24, %25 : vector<16x768xf32>
    %c0_9 = arith.constant 0 : index
    %c0_10 = arith.constant 0 : index
    %27 = vector.load %arg3[%c0_9, %c0_10] : memref<16x768xf32, #tpu.memory_space<vmem>>, vector<16x768xf32>
    tpu.vector_store %arg3[%c0_9, %c0_10], %26 {strides = array<i32>} : memref<16x768xf32, #tpu.memory_space<vmem>>, vector<16x768xf32>,
    return
  }
  func.func @transform_0(%arg0: i32) -> (i32, i32) {
    %c0_i32 = arith.constant 0 : i32
    %c0_i32_0 = arith.constant 0 : i32
    return %arg0, %c0_i32 : i32, i32
  }
  func.func @transform_1(%arg0: i32) -> (i32, i32) {
    %c0_i32 = arith.constant 0 : i32
    %c0_i32_0 = arith.constant 0 : i32
    %c0_i32_1 = arith.constant 0 : i32
    return %c0_i32, %c0_i32_0 : i32, i32
  }
  func.func @transform_2(%arg0: i32) -> (i32, i32) {
    %c0_i32 = arith.constant 0 : i32
    %c0_i32_0 = arith.constant 0 : i32
    return %arg0, %c0_i32 : i32, i32
  }
}

</mosaic_0001>

<llo_original>
// kernel: tpu_custom_call.1
$region0: #{tpu_custom_call.1}
  #allocation0 [shape = 'u32[]', space=smem, size = 0x4, offset = 0x4, fixed_abs, tag = 'smem constant byte address 0x4 - core index']
  #allocation1 [shape = 'u32[144,128]{1,0:T(1,128)}', space=vmem, size = 0x12000, scoped, tag = 'internal scratch']
  %s0 = inlined_call_operand.hbm [shape: f32[16,768], index: 0, kind: input, shape index: {}]
  %s1 = inlined_call_operand.hbm [shape: f32[2,768], index: 1, kind: input, shape index: {}]
  %s2 = inlined_call_operand.hbm [shape: f32[16,768], index: 2, kind: output, shape index: {}]
  %s3 = sld [smem:[#allocation0]]
  $region26: #{tpu_custom_call.1} parent=0
    _
  %s5 = ssub.s32 1, %s3
  %s6 = scalar_select 0, %s5, %s3
  $region1: #{tpu_custom_call.1} parent=0
    #allocation2 [shape = 'u8[49152]{0}', space=vmem, size = 0xc000, scoped, tag = 'input window, operand 0, single buffered']
    #allocation3 [shape = 's32[1]{0}', space=sflag, size = 0x4, scoped, tag = 'scoped memory for tpu_custom_call.1']
    #allocation4 [shape = 's32[1]{0}', space=sflag, size = 0x4, scoped, tag = 'scoped memory for tpu_custom_call.1']
    #allocation5 [shape = 'u8[6144]{0}', space=vmem, size = 0x1800, scoped, tag = 'input window, operand 1, single buffered']
    #allocation6 [shape = 's32[1]{0}', space=sflag, size = 0x4, scoped, tag = 'scoped memory for tpu_custom_call.1']
    #allocation7 [shape = 'u8[49152]{0}', space=vmem, size = 0xc000, scoped, tag = 'output window, operand 0, single buffered']
    %7 = vsyncpa [#allocation3], 0
    %8 = vsyncpa [#allocation6], 0
    %9 = vsyncpa [#allocation4], 0
    // Predicated region
    $region2: #{tpu_custom_call.1} parent=1 // pred_check
      _
    $region3: #{tpu_custom_call.1} parent=1 // pred_check_branch
      %11 = sbr.rel (0) target = $region5
    $region4: #{tpu_custom_call.1} parent=1 // pred_region
      %s13 = ssub.s32 1536, 1536
      %14 = vsyncadd [#allocation3], %s13
      %s15 = sshll.u32 [#allocation2], 4
      %s16 = int_to_ptr.vmem [resolvable:$true] %s15
      %21 = dma.hbm_to_vmem [thread:$0]  %s0, 1536, %s16, [#allocation3], 768, 768, 48
    $region5: #{tpu_custom_call.1} parent=1 // pred_fallthru
      _
    // Predicated region
    $region6: #{tpu_custom_call.1} parent=1 // pred_check
      _
    $region7: #{tpu_custom_call.1} parent=1 // pred_check_branch
      %23 = sbr.rel (0) target = $region9
    $region8: #{tpu_custom_call.1} parent=1 // pred_region
      %s25 = ssub.s32 192, 192
      %26 = vsyncadd [#allocation6], %s25
      %s28 = sshll.u32 [#allocation5], 4
      %s29 = int_to_ptr.vmem [resolvable:$true] %s28
      %31 = dma.hbm_to_vmem [thread:$0]  %s1, 192, %s29, [#allocation6]
    $region9: #{tpu_custom_call.1} parent=1 // pred_fallthru
      _
    // Predicated region
    $region10: #{tpu_custom_call.1} parent=1 // pred_check
      _
    $region11: #{tpu_custom_call.1} parent=1 // pred_check_branch
      %33 = sbr.rel (0) target = $region13
    $region12: #{tpu_custom_call.1} parent=1 // pred_region
      %34 = dma.done [#allocation3], 1536
    $region13: #{tpu_custom_call.1} parent=1 // pred_fallthru
      _
    // Predicated region
    $region14: #{tpu_custom_call.1} parent=1 // pred_check
      _
    $region15: #{tpu_custom_call.1} parent=1 // pred_check_branch
      %36 = sbr.rel (0) target = $region17
    $region16: #{tpu_custom_call.1} parent=1 // pred_region
      %37 = dma.done [#allocation6], 192
    $region17: #{tpu_custom_call.1} parent=1 // pred_fallthru
      _
    %v38 = vld [vmem:[#allocation2] sm:$0xff]
    %v39 = vld [vmem:[#allocation2 + $0x8] sm:$0xff]
    %v40 = vld [vmem:[#allocation2 + $0x10] sm:$0xff]
    %v41 = vld [vmem:[#allocation2 + $0x18] sm:$0xff]
    %v42 = vld [vmem:[#allocation2 + $0x20] sm:$0xff]
    %v43 = vld [vmem:[#allocation2 + $0x28] sm:$0xff]
    %v44 = vld [vmem:[#allocation2 + $0x30] sm:$0xff]
    %v45 = vld [vmem:[#allocation2 + $0x38] sm:$0xff]
    %v46 = vld [vmem:[#allocation2 + $0x40] sm:$0xff]
    %v47 = vld [vmem:[#allocation2 + $0x48] sm:$0xff]
    %v48 = vld [vmem:[#allocation2 + $0x50] sm:$0xff]
    %v49 = vld [vmem:[#allocation2 + $0x58] sm:$0xff]
    %v50 = vadd.f32 %v38, %v39
    %v51 = vadd.f32 %v50, %v40
    %v52 = vadd.f32 %v51, %v41
    %v53 = vadd.f32 %v52, %v42
    %v54 = vadd.f32 %v53, %v43
    %55 = vadd.xlane.f32.xlu0 %v54
    %v56 = vpop.xlane.xlu0 %55
    %v57 = vadd.f32 %v44, %v45
    %v58 = vadd.f32 %v57, %v46
    %v59 = vadd.f32 %v58, %v47
    %v60 = vadd.f32 %v59, %v48
    %v61 = vadd.f32 %v60, %v49
    %62 = vadd.xlane.f32.xlu0 %v61
    %v63 = vpop.xlane.xlu0 %62
    %v64 = vrcp.pop 768.0
    %v65 = vmul.f32 %v56, %v64
    %v66 = vmul.f32 %v63, %v64
    %v67 = vmul.f32 %v38, %v38
    %v68 = vmul.f32 %v39, %v39
    %v69 = vmul.f32 %v40, %v40
    %v70 = vmul.f32 %v41, %v41
    %v71 = vmul.f32 %v42, %v42
    %v72 = vmul.f32 %v43, %v43
    %v73 = vmul.f32 %v44, %v44
    %v74 = vmul.f32 %v45, %v45
    %v75 = vmul.f32 %v46, %v46
    %v76 = vmul.f32 %v47, %v47
    %v77 = vmul.f32 %v48, %v48
    %v78 = vmul.f32 %v49, %v49
    %v79 = vadd.f32 %v67, %v68
    %v80 = vadd.f32 %v79, %v69
    %v81 = vadd.f32 %v80, %v70
    %v82 = vadd.f32 %v81, %v71
    %v83 = vadd.f32 %v82, %v72
    %84 = vadd.xlane.f32.xlu0 %v83
    %v85 = vpop.xlane.xlu0 %84
    %v86 = vadd.f32 %v73, %v74
    %v87 = vadd.f32 %v86, %v75
    %v88 = vadd.f32 %v87, %v76
    %v89 = vadd.f32 %v88, %v77
    %v90 = vadd.f32 %v89, %v78
    %91 = vadd.xlane.f32.xlu0 %v90
    %v92 = vpop.xlane.xlu0 %91
    %v93 = vmul.f32 %v85, %v64
    %v94 = vmul.f32 %v92, %v64
    %v95 = vmul.f32 %v65, %v65
    %v96 = vmul.f32 %v66, %v66
    %v97 = vsub.f32 %v93, %v95
    %v98 = vsub.f32 %v94, %v96
    %v99 = vmax.f32 %v97, 0.0
    %v100 = vmax.f32 %v98, 0.0
    %v101 = vadd.f32 %v99, 1e-05
    %v102 = vadd.f32 %v100, 1e-05
    %v103 = vrsqrt.pop %v101
    %v104 = vrsqrt.pop %v102
    %v105 = vld [vmem:[#allocation5] ss:$2 sm:$0x3f]
    %s106 = scalar_lea.vmem [#allocation5], 1
    %v107 = vld [vmem:[%s106] ss:$2 sm:$0x3f]
    %v108 = vsub.f32 %v38, %v65
    %v109 = vsub.f32 %v39, %v65
    %v110 = vsub.f32 %v40, %v65
    %v111 = vsub.f32 %v41, %v65
    %v112 = vsub.f32 %v42, %v65
    %v113 = vsub.f32 %v43, %v65
    %v114 = vsub.f32 %v44, %v66
    %v115 = vsub.f32 %v45, %v66
    %v116 = vsub.f32 %v46, %v66
    %v117 = vsub.f32 %v47, %v66
    %v118 = vsub.f32 %v48, %v66
    %v119 = vsub.f32 %v49, %v66
    %v120 = vmul.f32 %v108, %v103
    %v121 = vmul.f32 %v109, %v103
    %v122 = vmul.f32 %v110, %v103
    %v123 = vmul.f32 %v111, %v103
    %v124 = vmul.f32 %v112, %v103
    %v125 = vmul.f32 %v113, %v103
    %v126 = vmul.f32 %v114, %v104
    %v127 = vmul.f32 %v115, %v104
    %v128 = vmul.f32 %v116, %v104
    %v129 = vmul.f32 %v117, %v104
    %v130 = vmul.f32 %v118, %v104
    %v131 = vmul.f32 %v119, %v104
    %v133 = vlaneseq
    %v134 = vshrl.u32 %v133, 7
    %v135 = vsub.s32 0, %v134
    %v136 = vrot.slane %v105, %v135
    %v137 = vlaneseq
    %v138 = vshrl.u32 %v137, 7
    %v139 = vsub.s32 1, %v138
    %v140 = vrot.slane %v105, %v139
    %v141 = vlaneseq
    %v142 = vshrl.u32 %v141, 7
    %v143 = vsub.s32 2, %v142
    %v144 = vrot.slane %v105, %v143
    %v145 = vlaneseq
    %v146 = vshrl.u32 %v145, 7
    %v147 = vsub.s32 3, %v146
    %v148 = vrot.slane %v105, %v147
    %v149 = vlaneseq
    %v150 = vshrl.u32 %v149, 7
    %v151 = vsub.s32 4, %v150
    %v152 = vrot.slane %v105, %v151
    %v153 = vlaneseq
    %v154 = vshrl.u32 %v153, 7
    %v155 = vsub.s32 5, %v154
    %v156 = vrot.slane %v105, %v155
    %v163 = vmul.f32 %v120, %v136
    %v164 = vmul.f32 %v121, %v140
    %v165 = vmul.f32 %v122, %v144
    %v166 = vmul.f32 %v123, %v148
    %v167 = vmul.f32 %v124, %v152
    %v168 = vmul.f32 %v125, %v156
    %v169 = vmul.f32 %v126, %v136
    %v170 = vmul.f32 %v127, %v140
    %v171 = vmul.f32 %v128, %v144
    %v172 = vmul.f32 %v129, %v148
    %v173 = vmul.f32 %v130, %v152
    %v174 = vmul.f32 %v131, %v156
    %v176 = vlaneseq
    %v177 = vshrl.u32 %v176, 7
    %v178 = vsub.s32 0, %v177
    %v179 = vrot.slane %v107, %v178
    %v180 = vlaneseq
    %v181 = vshrl.u32 %v180, 7
    %v182 = vsub.s32 1, %v181
    %v183 = vrot.slane %v107, %v182
    %v184 = vlaneseq
    %v185 = vshrl.u32 %v184, 7
    %v186 = vsub.s32 2, %v185
    %v187 = vrot.slane %v107, %v186
    %v188 = vlaneseq
    %v189 = vshrl.u32 %v188, 7
    %v190 = vsub.s32 3, %v189
    %v191 = vrot.slane %v107, %v190
    %v192 = vlaneseq
    %v193 = vshrl.u32 %v192, 7
    %v194 = vsub.s32 4, %v193
    %v195 = vrot.slane %v107, %v194
    %v196 = vlaneseq
    %v197 = vshrl.u32 %v196, 7
    %v198 = vsub.s32 5, %v197
    %v199 = vrot.slane %v107, %v198
    %v206 = vadd.f32 %v163, %v179
    %v207 = vadd.f32 %v164, %v183
    %v208 = vadd.f32 %v165, %v187
    %v209 = vadd.f32 %v166, %v191
    %v210 = vadd.f32 %v167, %v195
    %v211 = vadd.f32 %v168, %v199
    %v212 = vadd.f32 %v169, %v179
    %v213 = vadd.f32 %v170, %v183
    %v214 = vadd.f32 %v171, %v187
    %v215 = vadd.f32 %v172, %v191
    %v216 = vadd.f32 %v173, %v195
    %v217 = vadd.f32 %v174, %v199
    %218 = vst [vmem:[#allocation7] sm:$0xff] %v206
    %219 = vst [vmem:[#allocation7 + $0x8] sm:$0xff] %v207
    %220 = vst [vmem:[#allocation7 + $0x10] sm:$0xff] %v208
    %221 = vst [vmem:[#allocation7 + $0x18] sm:$0xff] %v209
    %222 = vst [vmem:[#allocation7 + $0x20] sm:$0xff] %v210
    %223 = vst [vmem:[#allocation7 + $0x28] sm:$0xff] %v211
    %224 = vst [vmem:[#allocation7 + $0x30] sm:$0xff] %v212
    %225 = vst [vmem:[#allocation7 + $0x38] sm:$0xff] %v213
    %226 = vst [vmem:[#allocation7 + $0x40] sm:$0xff] %v214
    %227 = vst [vmem:[#allocation7 + $0x48] sm:$0xff] %v215
    %228 = vst [vmem:[#allocation7 + $0x50] sm:$0xff] %v216
    %229 = vst [vmem:[#allocation7 + $0x58] sm:$0xff] %v217
    // Predicated region
    $region18: #{tpu_custom_call.1} parent=1 // pred_check
      _
    $region19: #{tpu_custom_call.1} parent=1 // pred_check_branch
      %231 = sbr.rel (0) target = $region21
    $region20: #{tpu_custom_call.1} parent=1 // pred_region
      %s233 = ssub.s32 1536, 1536
      %234 = vsyncadd [#allocation4], %s233
      %s235 = sshll.u32 [#allocation7], 4
      %s236 = int_to_ptr.vmem [resolvable:$true] %s235
      %241 = dma.vmem_to_hbm [thread:$0]  %s236, 1536, %s2, [#allocation4], 768, 768, 48
    $region21: #{tpu_custom_call.1} parent=1 // pred_fallthru
      _
    // Predicated region
    $region22: #{tpu_custom_call.1} parent=1 // pred_check
      _
    $region23: #{tpu_custom_call.1} parent=1 // pred_check_branch
      %243 = sbr.rel (0) target = $region25
    $region24: #{tpu_custom_call.1} parent=1 // pred_region
      %244 = dma.done [#allocation4], 1536
    $region25: #{tpu_custom_call.1} parent=1 // pred_fallthru
      _
    %245 = vsyncpa [#allocation3], 1
    %246 = vsyncpa [#allocation6], 1
    %247 = vsyncpa [#allocation4], 1

</llo_original>
